<compile_context>
chip_gen: v6e
topology: v6e:2x2x1
jax: 0.10.0
libtpu: 0.0.40
codegen_flags: <defaults>
</compile_context>

<pallas_src>
import functools
import math

import jax
import jax.numpy as jnp
from jax import lax
from jax.experimental import pallas as pl
from jax.experimental.pallas import tpu as pltpu

F32 = jnp.float32
BF16 = jnp.bfloat16


# --------------------------------------------------------------------------
# Helpers
# --------------------------------------------------------------------------
def _layernorm(h, g_ref, b_ref, eps=1e-5):
    """f32 LayerNorm over the last axis; gamma/beta refs are (1, C)."""
    mu = jnp.mean(h, axis=-1, keepdims=True)
    xc = h - mu
    var = jnp.mean(xc * xc, axis=-1, keepdims=True)
    return xc * lax.rsqrt(var + eps) * g_ref[0] + b_ref[0]


def _vmem_limit_bytes():
    """Generation-aware VMEM budget (75% of capacity, capped at 100 MiB)."""
    try:
        cap = int(pltpu.get_tpu_info().vmem_capacity_bytes)
    except Exception:
        cap = 64 * 1024 * 1024          # conservative (v7x-sized) fallback
    return min((cap * 3) // 4, 100 * 1024 * 1024)


# --------------------------------------------------------------------------
# Kernel A: LayerNorm-1 + fused QKV projection (full-width matmul)
# --------------------------------------------------------------------------
def _qkv_kernel(n_head, x_ref, g_ref, b_ln_ref, w_ref, b_ref,
                q_ref, k_ref, v_ref):
    C = x_ref.shape[2]
    hs = C // n_head
    scale = 1.0 / math.sqrt(hs)

    h = _layernorm(x_ref[0].astype(F32), g_ref, b_ln_ref).astype(BF16)
    qkv = jnp.dot(h, w_ref[...], preferred_element_type=F32) + b_ref[0]
    q_ref[0] = (qkv[:, 0 * C:1 * C] * scale).astype(BF16)   # scale folded in
    k_ref[0] = qkv[:, 1 * C:2 * C].astype(BF16)
    v_ref[0] = qkv[:, 2 * C:3 * C].astype(BF16)


# --------------------------------------------------------------------------
# Kernel B: flash attention (online softmax over kv tiles) + output
#           projection (single (C,C) matmul) + residual
# --------------------------------------------------------------------------
def _flash_attn_kernel(n_head, q_ref, k_ref, v_ref, x_ref, w_o_ref, b_o_ref,
                       o_ref, m_scr, l_scr, acc_scr):
    qi = pl.program_id(1)
    ki = pl.program_id(2)
    n_kv = pl.num_programs(2)
    tq = q_ref.shape[1]
    tk = k_ref.shape[1]
    C = q_ref.shape[2]
    hs = C // n_head

    # ---- first kv step for this (batch, q-tile): reset online-softmax state
    @pl.when(ki == 0)
    def _init():
        m_scr[...] = jnp.full(m_scr.shape, -jnp.inf, F32)
        l_scr[...] = jnp.zeros(l_scr.shape, F32)
        acc_scr[...] = jnp.zeros(acc_scr.shape, F32)

    # Last kv block that contributes to this q tile, and number of kv blocks
    # strictly below the diagonal (no mask needed for those).
    kv_last = ((qi + 1) * tq - 1) // tk
    n_full = (qi * tq + 1) // tk

    def _accumulate(masked):
        q_t = q_ref[0]                      # (tq, C) bf16, pre-scaled
        k_t = k_ref[0]                      # (tk, C) bf16
        v_t = v_ref[0]                      # (tk, C) bf16
        if masked:
            row = qi * tq + lax.broadcasted_iota(jnp.int32, (tq, tk), 0)
            col = ki * tk + lax.broadcasted_iota(jnp.int32, (tq, tk), 1)
            allowed = col <= row
        for hd in range(n_head):
            c0 = hd * hs
            q_h = q_t[:, c0:c0 + hs]
            k_h = k_t[:, c0:c0 + hs]
            v_h = v_t[:, c0:c0 + hs]
            # s = q @ k^T, contracting the head dim (no transpose materialized)
            s = lax.dot_general(q_h, k_h, (((1,), (1,)), ((), ())),
                                preferred_element_type=F32)
            if masked:
                s = jnp.where(allowed, s, F32(-1e30))
            m_prev = m_scr[hd]
            m_new = jnp.maximum(m_prev, jnp.max(s, axis=-1, keepdims=True))
            alpha = jnp.exp(m_prev - m_new)
            p = jnp.exp(s - m_new)
            l_scr[hd] = alpha * l_scr[hd] + jnp.sum(p, axis=-1, keepdims=True)
            acc_scr[:, c0:c0 + hs] = (
                alpha * acc_scr[:, c0:c0 + hs]
                + jnp.dot(p.astype(BF16), v_h, preferred_element_type=F32))
            m_scr[hd] = m_new

    # Strictly-below-diagonal tiles: no mask work at all.
    @pl.when(ki < n_full)
    def _attend_full():
        _accumulate(masked=False)

    # Tiles straddling the diagonal: apply the causal mask.
    @pl.when(jnp.logical_and(ki >= n_full, ki <= kv_last))
    def _attend_masked():
        _accumulate(masked=True)

    # ---- last kv step: normalize, single (tq,C)@(C,C) output projection,
    #      residual with x, write the output tile.
    @pl.when(ki == n_kv - 1)
    def _finalize():
        for hd in range(n_head):
            c0 = hd * hs
            inv_l = pl.reciprocal(l_scr[hd], approx=True)
            acc_scr[:, c0:c0 + hs] = acc_scr[:, c0:c0 + hs] * inv_l
        y = acc_scr[...].astype(BF16)                       # (tq, C), lane-dense
        attn = jnp.dot(y, w_o_ref[...], preferred_element_type=F32) + b_o_ref[0]
        o_ref[0] = (x_ref[0].astype(F32) + attn).astype(o_ref.dtype)


# --------------------------------------------------------------------------
# Kernel C: LayerNorm-2 + MLP (GELU tanh, hidden dim chunked) + residual
# --------------------------------------------------------------------------
def _mlp_kernel(hidden_chunk, x_ref, g_ref, b_ln_ref, w_fc_ref, b_fc_ref,
                w_mp_ref, b_mp_ref, o_ref):
    H = w_fc_ref.shape[1]
    x1 = x_ref[0].astype(F32)
    h2 = _layernorm(x1, g_ref, b_ln_ref).astype(BF16)
    acc = x1 + b_mp_ref[0]                  # residual + output-proj bias
    b_fc = b_fc_ref[0]
    for c0 in range(0, H, hidden_chunk):    # cap the live (tq, chunk) f32 temp
        c1 = c0 + hidden_chunk
        ff = jnp.dot(h2, w_fc_ref[:, c0:c1],
                     preferred_element_type=F32) + b_fc[c0:c1]
        ff = jax.nn.gelu(ff, approximate=True).astype(BF16)
        acc = acc + jnp.dot(ff, w_mp_ref[c0:c1, :], preferred_element_type=F32)
    o_ref[0] = acc.astype(o_ref.dtype)


# --------------------------------------------------------------------------
# Wrapper
# --------------------------------------------------------------------------
def gpt2_block(x, params, n_head, block_q=None, block_kv=None, mlp_chunk=None):
    """Fused GPT-2 Block forward.  x: (B, T, C) float32."""
    B, T, C = x.shape
    assert C % n_head == 0 and C % 128 == 0

    if block_q is None:
        block_q = min(T, 128)
    if block_kv is None:
        block_kv = min(T, 256) if T % 256 == 0 else min(T, 128)
    assert T % block_q == 0 and T % block_kv == 0
    assert block_q % 8 == 0 and block_kv % 8 == 0

    H = 4 * C
    if mlp_chunk is None:
        mlp_chunk = min(H, 512)
    assert H % mlp_chunk == 0 and mlp_chunk % 128 == 0

    vmem = _vmem_limit_bytes()
    # Grid-invariant weights: whole-array, single-buffered, VMEM-resident.
    wspec = pl.BlockSpec(memory_space=pltpu.MemorySpace.VMEM)

    ln1_g = params["ln1_g"].reshape(1, C).astype(F32)
    ln1_b = params["ln1_b"].reshape(1, C).astype(F32)
    ln2_g = params["ln2_g"].reshape(1, C).astype(F32)
    ln2_b = params["ln2_b"].reshape(1, C).astype(F32)
    w_qkv = params["w_qkv"].astype(BF16)                     # (C, 3C)
    b_qkv = params["b_qkv"].reshape(1, 3 * C).astype(F32)
    w_ap = params["w_aproj"].astype(BF16)                    # (C, C)
    b_ap = params["b_aproj"].reshape(1, C).astype(F32)
    w_fc = params["w_fc"].astype(BF16)                       # (C, 4C)
    b_fc = params["b_fc"].reshape(1, 4 * C).astype(F32)
    w_mp = params["w_mproj"].astype(BF16)                    # (4C, C)
    b_mp = params["b_mproj"].reshape(1, C).astype(F32)

    n_q = T // block_q
    n_kv = T // block_kv
    tok_spec_q = pl.BlockSpec((1, block_q, C), lambda b, i: (b, i, 0))

    # ---- Kernel A: LN1 + QKV -------------------------------------------
    q, k, v = pl.pallas_call(
        functools.partial(_qkv_kernel, n_head),
        out_shape=(jax.ShapeDtypeStruct((B, T, C), BF16),) * 3,
        grid_spec=pltpu.PrefetchScalarGridSpec(
            num_scalar_prefetch=0,
            grid=(B, n_q),
            in_specs=[tok_spec_q, wspec, wspec, wspec, wspec],
            out_specs=(tok_spec_q,) * 3),
        compiler_params=pltpu.CompilerParams(
            dimension_semantics=("parallel", "parallel"),
            vmem_limit_bytes=vmem),
    )(x, ln1_g, ln1_b, w_qkv, b_qkv)

    # ---- Kernel B: flash attention + output projection + residual -------
    def q_index(b, qi, ki):
        return (b, qi, 0)

    def kv_index(b, qi, ki):
        # Clamp at the causal diagonal: above-diagonal tiles are never DMA'd
        # (their compute is skipped inside the kernel).
        kv_last = ((qi + 1) * block_q - 1) // block_kv
        return (b, jnp.minimum(ki, kv_last), 0)

    x1 = pl.pallas_call(
        functools.partial(_flash_attn_kernel, n_head),
        out_shape=jax.ShapeDtypeStruct((B, T, C), x.dtype),
        grid_spec=pltpu.PrefetchScalarGridSpec(
            num_scalar_prefetch=0,
            grid=(B, n_q, n_kv),
            in_specs=[
                pl.BlockSpec((1, block_q, C), q_index),
                pl.BlockSpec((1, block_kv, C), kv_index),
                pl.BlockSpec((1, block_kv, C), kv_index),
                pl.BlockSpec((1, block_q, C), q_index),
                wspec, wspec],
            out_specs=pl.BlockSpec((1, block_q, C), q_index),
            scratch_shapes=[
                pltpu.VMEM((n_head, block_q, 1), F32),   # running max
                pltpu.VMEM((n_head, block_q, 1), F32),   # running sum
                pltpu.VMEM((block_q, C), F32),           # lane-dense accumulator
            ]),
        compiler_params=pltpu.CompilerParams(
            dimension_semantics=("parallel", "parallel", "arbitrary"),
            vmem_limit_bytes=vmem),
    )(q, k, v, x, w_ap, b_ap)

    # ---- Kernel C: LN2 + MLP + residual ----------------------------------
    out = pl.pallas_call(
        functools.partial(_mlp_kernel, mlp_chunk),
        out_shape=jax.ShapeDtypeStruct((B, T, C), x.dtype),
        grid_spec=pltpu.PrefetchScalarGridSpec(
            num_scalar_prefetch=0,
            grid=(B, n_q),
            in_specs=[tok_spec_q, wspec, wspec, wspec, wspec, wspec, wspec],
            out_specs=tok_spec_q),
        compiler_params=pltpu.CompilerParams(
            dimension_semantics=("parallel", "parallel"),
            vmem_limit_bytes=vmem),
    )(x1, ln2_g, ln2_b, w_fc, b_fc, w_mp, b_mp)

    return out


# --------------------------------------------------------------------------
# Pure-JAX reference (for correctness check)
# --------------------------------------------------------------------------
def gpt2_block_ref(x, params, n_head):
    B, T, C = x.shape
    hs = C // n_head

    def ln(h, g, b):
        mu = jnp.mean(h, axis=-1, keepdims=True)
        var = jnp.mean((h - mu) ** 2, axis=-1, keepdims=True)
        return (h - mu) / jnp.sqrt(var + 1e-5) * g + b

    h = ln(x, params["ln1_g"], params["ln1_b"])
    qkv = h @ params["w_qkv"] + params["b_qkv"]
    q, k, v = jnp.split(qkv, 3, axis=-1)
    q = q.reshape(B, T, n_head, hs).transpose(0, 2, 1, 3)
    k = k.reshape(B, T, n_head, hs).transpose(0, 2, 1, 3)
    v = v.reshape(B, T, n_head, hs).transpose(0, 2, 1, 3)
    s = jnp.einsum("bhtd,bhsd->bhts", q, k) / math.sqrt(hs)
    mask = jnp.tril(jnp.ones((T, T), dtype=bool))
    s = jnp.where(mask, s, -jnp.inf)
    p = jax.nn.softmax(s, axis=-1)
    y = jnp.einsum("bhts,bhsd->bhtd", p, v).transpose(0, 2, 1, 3).reshape(B, T, C)
    x = x + y @ params["w_aproj"] + params["b_aproj"]

    h2 = ln(x, params["ln2_g"], params["ln2_b"])
    ff = jax.nn.gelu(h2 @ params["w_fc"] + params["b_fc"], approximate=True)
    return x + ff @ params["w_mproj"] + params["b_mproj"]


# --------------------------------------------------------------------------
# Main
# --------------------------------------------------------------------------
if __name__ == "__main__":
    # Small but lane-dense sizes: C = 128 (full lane width), head_size = 64
    # (real GPT-2 head size), T = 128 split into 64-row tiles so the flash
    # loop, causal tile skipping and masked/unmasked paths are all exercised.
    B, T, C, n_head = 2, 128, 128, 2

    key = jax.random.PRNGKey(0)
    ks = jax.random.split(key, 12)

    params = {
        "ln1_g": 1.0 + 0.1 * jax.random.normal(ks[0], (C,), jnp.float32),
        "ln1_b": 0.1 * jax.random.normal(ks[1], (C,), jnp.float32),
        "ln2_g": 1.0 + 0.1 * jax.random.normal(ks[2], (C,), jnp.float32),
        "ln2_b": 0.1 * jax.random.normal(ks[3], (C,), jnp.float32),
        "w_qkv": 0.02 * jax.random.normal(ks[4], (C, 3 * C), jnp.float32),
        "b_qkv": 0.02 * jax.random.normal(ks[5], (3 * C,), jnp.float32),
        "w_aproj": 0.02 * jax.random.normal(ks[6], (C, C), jnp.float32),
        "b_aproj": 0.02 * jax.random.normal(ks[7], (C,), jnp.float32),
        "w_fc": 0.02 * jax.random.normal(ks[8], (C, 4 * C), jnp.float32),
        "b_fc": 0.02 * jax.random.normal(ks[9], (4 * C,), jnp.float32),
        "w_mproj": 0.02 * jax.random.normal(ks[10], (4 * C, C), jnp.float32),
        "b_mproj": 0.02 * jax.random.normal(ks[11], (C,), jnp.float32),
    }

    x = jax.random.normal(jax.random.PRNGKey(1), (B, T, C), jnp.float32)

    out = gpt2_block(x, params, n_head, block_q=64, block_kv=64)
    out = jax.block_until_ready(out)

    ref = gpt2_block_ref(x, params, n_head)

    assert out.shape == (B, T, C)
    max_err = float(jnp.max(jnp.abs(out - ref)))
    # bf16 MXU operands (f32 accumulation) + approximate reciprocal loosen the
    # tolerance relative to the pure-f32 reference.
    assert jnp.allclose(out, ref, rtol=2e-2, atol=2e-2), max_err

    print("KERNEL_OK")
</pallas_src>

<mosaic_0001>
module attributes {stable_mosaic.version = 11 : i64} {
  func.func @_qkv_kernel(%arg0: i32, %arg1: i32, %arg2: memref<1x64x128xf32, #tpu.memory_space<vmem>>, %arg3: memref<1x128xf32, #tpu.memory_space<vmem>>, %arg4: memref<1x128xf32, #tpu.memory_space<vmem>>, %arg5: memref<128x384xbf16, #tpu.memory_space<vmem>>, %arg6: memref<1x384xf32, #tpu.memory_space<vmem>>, %arg7: memref<1x64x128xbf16, #tpu.memory_space<vmem>>, %arg8: memref<1x64x128xbf16, #tpu.memory_space<vmem>>, %arg9: memref<1x64x128xbf16, #tpu.memory_space<vmem>>) attributes {dimension_semantics = [#tpu.dimension_semantics<parallel>, #tpu.dimension_semantics<parallel>], iteration_bounds = array<i64: 2, 2>, scalar_prefetch = 0 : i64, scratch_operands = 0 : i64, tpu.core_type = #tpu.core_type<tc>, window_params = [{transform_indices = @transform_0, window_bounds = array<i64: 1, 64, 128>}, {pipeline_mode = #tpu.pipeline_mode<synchronous>, transform_indices = @transform_1, window_bounds = array<i64: 1, 128>}, {pipeline_mode = #tpu.pipeline_mode<synchronous>, transform_indices = @transform_2, window_bounds = array<i64: 1, 128>}, {pipeline_mode = #tpu.pipeline_mode<synchronous>, transform_indices = @transform_3, window_bounds = array<i64: 128, 384>}, {pipeline_mode = #tpu.pipeline_mode<synchronous>, transform_indices = @transform_4, window_bounds = array<i64: 1, 384>}, {transform_indices = @transform_5, window_bounds = array<i64: 1, 64, 128>}, {transform_indices = @transform_6, window_bounds = array<i64: 1, 64, 128>}, {transform_indices = @transform_7, window_bounds = array<i64: 1, 64, 128>}]} {
    %c0 = arith.constant 0 : index
    %c0_0 = arith.constant 0 : index
    %c0_1 = arith.constant 0 : index
    %0 = vector.load %arg2[%c0, %c0_0, %c0_1] : memref<1x64x128xf32, #tpu.memory_space<vmem>>, vector<1x64x128xf32>
    %1 = vector.shape_cast %0 : vector<1x64x128xf32> to vector<64x128xf32>
    %cst = arith.constant dense<0.000000e+00> : vector<64xf32>
    %2 = vector.multi_reduction <add>, %1, %cst [1] : vector<64x128xf32> to vector<64xf32>
    %3 = vector.shape_cast %2 : vector<64xf32> to vector<64x1xf32>
    %cst_2 = arith.constant 1.280000e+02 : f32
    %4 = vector.broadcast %cst_2 : f32 to vector<64x1xf32>
    %5 = arith.divf %3, %4 : vector<64x1xf32>
    %6 = vector.broadcast %5 : vector<64x1xf32> to vector<64x128xf32>
    %7 = arith.subf %1, %6 : vector<64x128xf32>
    %8 = arith.mulf %7, %7 : vector<64x128xf32>
    %cst_3 = arith.constant dense<0.000000e+00> : vector<64xf32>
    %9 = vector.multi_reduction <add>, %8, %cst_3 [1] : vector<64x128xf32> to vector<64xf32>
    %10 = vector.shape_cast %9 : vector<64xf32> to vector<64x1xf32>
    %cst_4 = arith.constant 1.280000e+02 : f32
    %11 = vector.broadcast %cst_4 : f32 to vector<64x1xf32>
    %12 = arith.divf %10, %11 : vector<64x1xf32>
    %cst_5 = arith.constant 9.99999974E-6 : f32
    %13 = vector.broadcast %cst_5 : f32 to vector<64x1xf32>
    %14 = arith.addf %12, %13 : vector<64x1xf32>
    %15 = math.rsqrt %14 : vector<64x1xf32>
    %16 = vector.broadcast %15 : vector<64x1xf32> to vector<64x128xf32>
    %17 = arith.mulf %7, %16 : vector<64x128xf32>
    %c0_6 = arith.constant 0 : index
    %c0_7 = arith.constant 0 : index
    %18 = vector.load %arg3[%c0_6, %c0_7] : memref<1x128xf32, #tpu.memory_space<vmem>>, vector<1x128xf32>
    %19 = vector.shape_cast %18 : vector<1x128xf32> to vector<128xf32>
    %20 = vector.shape_cast %19 : vector<128xf32> to vector<1x128xf32>
    %21 = vector.broadcast %20 : vector<1x128xf32> to vector<64x128xf32>
    %22 = arith.mulf %17, %21 : vector<64x128xf32>
    %c0_8 = arith.constant 0 : index
    %c0_9 = arith.constant 0 : index
    %23 = vector.load %arg4[%c0_8, %c0_9] : memref<1x128xf32, #tpu.memory_space<vmem>>, vector<1x128xf32>
    %24 = vector.shape_cast %23 : vector<1x128xf32> to vector<128xf32>
    %25 = vector.shape_cast %24 : vector<128xf32> to vector<1x128xf32>
    %26 = vector.broadcast %25 : vector<1x128xf32> to vector<64x128xf32>
    %27 = arith.addf %22, %26 : vector<64x128xf32>
    %28 = arith.truncf %27 : vector<64x128xf32> to vector<64x128xbf16>
    %c0_10 = arith.constant 0 : index
    %c0_11 = arith.constant 0 : index
    %29 = vector.load %arg5[%c0_10, %c0_11] : memref<128x384xbf16, #tpu.memory_space<vmem>>, vector<128x384xbf16>
    %cst_12 = arith.constant dense<0.000000e+00> : vector<64x384xf32>
    %30 = tpu.matmul %28, %29, %cst_12 {dimension_numbers = #tpu.dot_dimension_numbers<[1], [0], [0], [1], [0, 0, 1, 1], [], []>} : vector<64x128xbf16>, vector<128x384xbf16>, vector<64x384xf32> -> vector<64x384xf32>
    %c0_13 = arith.constant 0 : index
    %c0_14 = arith.constant 0 : index
    %31 = vector.load %arg6[%c0_13, %c0_14] : memref<1x384xf32, #tpu.memory_space<vmem>>, vector<1x384xf32>
    %32 = vector.shape_cast %31 : vector<1x384xf32> to vector<384xf32>
    %33 = vector.shape_cast %32 : vector<384xf32> to vector<1x384xf32>
    %34 = vector.broadcast %33 : vector<1x384xf32> to vector<64x384xf32>
    %35 = arith.addf %30, %34 : vector<64x384xf32>
    %36 = vector.extract_strided_slice %35 {offsets = [0, 0], sizes = [64, 128], strides = [1, 1]} : vector<64x384xf32> to vector<64x128xf32>
    %cst_15 = arith.constant 1.250000e-01 : f32
    %37 = vector.broadcast %cst_15 : f32 to vector<64x128xf32>
    %38 = arith.mulf %36, %37 : vector<64x128xf32>
    %39 = arith.truncf %38 : vector<64x128xf32> to vector<64x128xbf16>
    %c0_16 = arith.constant 0 : index
    %c0_17 = arith.constant 0 : index
    %c0_18 = arith.constant 0 : index
    %40 = vector.load %arg7[%c0_16, %c0_17, %c0_18] : memref<1x64x128xbf16, #tpu.memory_space<vmem>>, vector<1x64x128xbf16>
    %41 = vector.shape_cast %40 : vector<1x64x128xbf16> to vector<64x128xbf16>
    %42 = vector.shape_cast %39 : vector<64x128xbf16> to vector<1x64x128xbf16>
    tpu.vector_store %arg7[%c0_16, %c0_17, %c0_18], %42 {strides = array<i32>} : memref<1x64x128xbf16, #tpu.memory_space<vmem>>, vector<1x64x128xbf16>,
    %43 = vector.extract_strided_slice %35 {offsets = [0, 128], sizes = [64, 128], strides = [1, 1]} : vector<64x384xf32> to vector<64x128xf32>
    %44 = arith.truncf %43 : vector<64x128xf32> to vector<64x128xbf16>
    %c0_19 = arith.constant 0 : index
    %c0_20 = arith.constant 0 : index
    %c0_21 = arith.constant 0 : index
    %45 = vector.load %arg8[%c0_19, %c0_20, %c0_21] : memref<1x64x128xbf16, #tpu.memory_space<vmem>>, vector<1x64x128xbf16>
    %46 = vector.shape_cast %45 : vector<1x64x128xbf16> to vector<64x128xbf16>
    %47 = vector.shape_cast %44 : vector<64x128xbf16> to vector<1x64x128xbf16>
    tpu.vector_store %arg8[%c0_19, %c0_20, %c0_21], %47 {strides = array<i32>} : memref<1x64x128xbf16, #tpu.memory_space<vmem>>, vector<1x64x128xbf16>,
    %48 = vector.extract_strided_slice %35 {offsets = [0, 256], sizes = [64, 128], strides = [1, 1]} : vector<64x384xf32> to vector<64x128xf32>
    %49 = arith.truncf %48 : vector<64x128xf32> to vector<64x128xbf16>
    %c0_22 = arith.constant 0 : index
    %c0_23 = arith.constant 0 : index
    %c0_24 = arith.constant 0 : index
    %50 = vector.load %arg9[%c0_22, %c0_23, %c0_24] : memref<1x64x128xbf16, #tpu.memory_space<vmem>>, vector<1x64x128xbf16>
    %51 = vector.shape_cast %50 : vector<1x64x128xbf16> to vector<64x128xbf16>
    %52 = vector.shape_cast %49 : vector<64x128xbf16> to vector<1x64x128xbf16>
    tpu.vector_store %arg9[%c0_22, %c0_23, %c0_24], %52 {strides = array<i32>} : memref<1x64x128xbf16, #tpu.memory_space<vmem>>, vector<1x64x128xbf16>,
    return
  }
  func.func @transform_0(%arg0: i32, %arg1: i32) -> (i32, i32, i32) {
    %c0_i32 = arith.constant 0 : i32
    %c0_i32_0 = arith.constant 0 : i32
    return %arg0, %arg1, %c0_i32 : i32, i32, i32
  }
  func.func @transform_1(%arg0: i32, %arg1: i32) -> (i32, i32) {
    %c0_i32 = arith.constant 0 : i32
    %c0_i32_0 = arith.constant 0 : i32
    %c0_i32_1 = arith.constant 0 : i32
    return %c0_i32, %c0_i32_0 : i32, i32
  }
  func.func @transform_2(%arg0: i32, %arg1: i32) -> (i32, i32) {
    %c0_i32 = arith.constant 0 : i32
    %c0_i32_0 = arith.constant 0 : i32
    %c0_i32_1 = arith.constant 0 : i32
    return %c0_i32, %c0_i32_0 : i32, i32
  }
  func.func @transform_3(%arg0: i32, %arg1: i32) -> (i32, i32) {
    %c0_i32 = arith.constant 0 : i32
    %c0_i32_0 = arith.constant 0 : i32
    %c0_i32_1 = arith.constant 0 : i32
    return %c0_i32, %c0_i32_0 : i32, i32
  }
  func.func @transform_4(%arg0: i32, %arg1: i32) -> (i32, i32) {
    %c0_i32 = arith.constant 0 : i32
    %c0_i32_0 = arith.constant 0 : i32
    %c0_i32_1 = arith.constant 0 : i32
    return %c0_i32, %c0_i32_0 : i32, i32
  }
  func.func @transform_5(%arg0: i32, %arg1: i32) -> (i32, i32, i32) {
    %c0_i32 = arith.constant 0 : i32
    %c0_i32_0 = arith.constant 0 : i32
    return %arg0, %arg1, %c0_i32 : i32, i32, i32
  }
  func.func @transform_6(%arg0: i32, %arg1: i32) -> (i32, i32, i32) {
    %c0_i32 = arith.constant 0 : i32
    %c0_i32_0 = arith.constant 0 : i32
    return %arg0, %arg1, %c0_i32 : i32, i32, i32
  }
  func.func @transform_7(%arg0: i32, %arg1: i32) -> (i32, i32, i32) {
    %c0_i32 = arith.constant 0 : i32
    %c0_i32_0 = arith.constant 0 : i32
    return %arg0, %arg1, %c0_i32 : i32, i32, i32
  }
}

</mosaic_0001>

<llo_original>
// kernel: tpu_custom_call.1
$region0: #{tpu_custom_call.1}
  #allocation0 [shape = 'u32[]', space=smem, size = 0x4, offset = 0x4, fixed_abs, tag = 'smem constant byte address 0x4 - core index']
  #allocation1 [shape = 'u32[144,128]{1,0:T(1,128)}', space=vmem, size = 0x12000, scoped, tag = 'internal scratch']
  %s0 = inlined_call_operand.hbm [shape: f32[2,128,128], index: 0, kind: input, shape index: {}]
  %s1 = inlined_call_operand.vmem [shape: f32[1,128], index: 1, kind: input, shape index: {}]
  %s2 = inlined_call_operand.vmem [shape: f32[1,128], index: 2, kind: input, shape index: {}]
  %s3 = inlined_call_operand.hbm [shape: bf16[128,384], index: 3, kind: input, shape index: {}]
  %s4 = inlined_call_operand.vmem [shape: f32[1,384], index: 4, kind: input, shape index: {}]
  %s5 = inlined_call_operand.hbm [shape: bf16[2,128,128], index: 5, kind: output, shape index: {0}]
  %s6 = inlined_call_operand.hbm [shape: bf16[2,128,128], index: 6, kind: output, shape index: {1}]
  %s7 = inlined_call_operand.hbm [shape: bf16[2,128,128], index: 7, kind: output, shape index: {2}]
  %8 = xla_tuple %s5, %s6, %s7
  %s9 = sld [smem:[#allocation0]]
  $region77: #{tpu_custom_call.1} parent=0
    _
  %s11 = ssub.s32 1, %s9
  %s12 = scalar_select 0, %s11, %s9
  $region1: #{tpu_custom_call.1} parent=0
    #allocation2 [shape = 'u8[65536]{0}', space=vmem, size = 0x10000, scoped, tag = 'input window, operand 0']
    #allocation3 [shape = 's32[2]{0}', space=sflag, size = 0x8, scoped, tag = 'scoped memory for tpu_custom_call.1']
    #allocation4 [shape = 's32[2]{0}', space=sflag, size = 0x8, scoped, tag = 'scoped memory for tpu_custom_call.1']
    #allocation5 [shape = 'u8[98304]{0}', space=vmem, size = 0x18000, scoped, tag = 'input window, operand 3, single buffered']
    #allocation6 [shape = 's32[1]{0}', space=sflag, size = 0x4, scoped, tag = 'scoped memory for tpu_custom_call.1']
    #allocation7 [shape = 'u8[32768]{0}', space=vmem, size = 0x8000, scoped, tag = 'output window, operand 0']
    #allocation8 [shape = 'u8[32768]{0}', space=vmem, size = 0x8000, scoped, tag = 'output window, operand 1']
    #allocation9 [shape = 's32[2]{0}', space=sflag, size = 0x8, scoped, tag = 'scoped memory for tpu_custom_call.1']
    #allocation10 [shape = 'u8[32768]{0}', space=vmem, size = 0x8000, scoped, tag = 'output window, operand 2']
    %13 = vsyncpa [#allocation3], 0
    %s14 = scalar_lea.sflag [#allocation3], 1
    %15 = vsyncpa %s14, 0
    %16 = vsyncpa [#allocation6], 0
    %17 = vsyncpa [#allocation4], 0
    %s18 = scalar_lea.sflag [#allocation4], 1
    %19 = vsyncpa %s18, 0
    %20 = vsyncpa [#allocation9], 0
    %s21 = scalar_lea.sflag [#allocation9], 1
    %22 = vsyncpa %s21, 0
    loop: start=0, step=1, limit=6
    $region2: #{tpu_custom_call.1} parent=1 // loop_pre_header
      _
    $region3: #{tpu_custom_call.1} parent=1 // loop_header
      %s24 = sphi 0, %s28
      %p25 = scmp.ge.s32.totalorder %s24, 6
      %s31 = sphi 0, %s43
      %s32 = sphi 0, %s39
      %s33 = sphi 0, %s31
      %s34 = sphi 0, %s32
      %s35 = sphi 0, %s33
      %s36 = sphi 0, %s34
      %s48 = sphi 0, %s50
      %s51 = sphi 0, %s48
      %s52 = sphi 0, %s51
      %s68 = sphi 0, %s52
      %s72 = sphi 0, %s72
      %s74 = sphi 0, %s72
      %s75 = sphi 0, %s74
      %s89 = sphi 0, %s75
      %s93 = sphi 0, %s93
      %s95 = sphi 0, %s93
      %s96 = sphi 0, %s95
      %s110 = sphi 0, %s96
      %s114 = sphi 0, %s114
      %s116 = sphi 0, %s114
      %s117 = sphi 0, %s116
      %s131 = sphi 0, %s117
      %s135 = sphi 0, %s135
      %s137 = sphi 0, %s135
      %s138 = sphi 0, %s137
      %s152 = sphi 0, %s138
      %s160 = sphi 0, %s162
      %s163 = sphi 0, %s160
      %s164 = sphi 0, %s163
      %s180 = sphi 0, %s164
      %s188 = sphi 0, %s190
      %s191 = sphi 0, %s188
      %s192 = sphi 0, %s191
      %s208 = sphi 0, %s192
      %s216 = sphi 0, %s218
      %s219 = sphi 0, %s216
      %s220 = sphi 0, %s219
      %s236 = sphi 0, %s220
    $region4: #{tpu_custom_call.1} parent=1 // loop_header_branch
      %27 = sbr.rel (%p25) target = $region8
    $region5: #{tpu_custom_call.1} parent=1 // loop_body
      %s29 = ssub.s32 %s24, 1
      %s30 = ssub.s32 %s24, 2
      %s37 = sadd.s32 1, %s32
      %p38 = scmp.ge.s32.totalorder %s37, 2
      %s39 = scalar_select %p38, 0, %s37
      %s40 = sadd.s32 1, %s31
      %s41 = scalar_select %p38, %s40, %s31
      %p42 = scmp.ge.s32.totalorder %s41, 2
      %s43 = scalar_select %p42, 0, %s41
      %s44 = ssub.s32 %s31, %s43
      %s45 = ssub.s32 %s32, %s39
      %s46 = sor.u32 %s44, %s45
      %p47 = scmp.eq.s32.totalorder %s46, 0
      %s49 = sadd.s32 %s48, 1
      %s50 = scalar_select %p47, %s48, %s49
      %p53 = pneg %p47
      %p54 = scmp.eq.s32.totalorder %s24, 3
      %p55 = por %p53, %p54
      %p56 = scmp.ne.s32.totalorder %s48, %s51
      %p57 = scmp.eq.s32.totalorder %s24, 0
      %p58 = por %p56, %p57
      %p59 = scmp.ne.s32.totalorder %s48, %s51
      %p60 = scmp.eq.s32.totalorder %s29, 3
      %p61 = por %p59, %p60
      %p62 = scmp.ne.s32.totalorder %s51, %s52
      %p63 = scmp.eq.s32.totalorder %s29, 0
      %p64 = por %p62, %p63
      %p65 = scmp.ne.s32.totalorder %s51, %s52
      %p66 = scmp.eq.s32.totalorder %s30, 3
      %p67 = por %p65, %p66
      %p69 = scmp.ne.s32.totalorder %s52, %s68
      %p70 = scmp.eq.s32.totalorder %s30, 0
      %p71 = por %p69, %p70
      %s73 = sadd.s32 %s72, 1
      %p76 = scmp.eq.s32.totalorder %s24, 3
      %p77 = scmp.ne.s32.totalorder %s72, %s74
      %p78 = scmp.eq.s32.totalorder %s24, 0
      %p79 = por %p77, %p78
      %p80 = scmp.ne.s32.totalorder %s72, %s74
      %p81 = scmp.eq.s32.totalorder %s29, 3
      %p82 = por %p80, %p81
      %p83 = scmp.ne.s32.totalorder %s74, %s75
      %p84 = scmp.eq.s32.totalorder %s29, 0
      %p85 = por %p83, %p84
      %p86 = scmp.ne.s32.totalorder %s74, %s75
      %p87 = scmp.eq.s32.totalorder %s30, 3
      %p88 = por %p86, %p87
      %p90 = scmp.ne.s32.totalorder %s75, %s89
      %p91 = scmp.eq.s32.totalorder %s30, 0
      %p92 = por %p90, %p91
      %s94 = sadd.s32 %s93, 1
      %p97 = scmp.eq.s32.totalorder %s24, 3
      %p98 = scmp.ne.s32.totalorder %s93, %s95
      %p99 = scmp.eq.s32.totalorder %s24, 0
      %p100 = por %p98, %p99
      %p101 = scmp.ne.s32.totalorder %s93, %s95
      %p102 = scmp.eq.s32.totalorder %s29, 3
      %p103 = por %p101, %p102
      %p104 = scmp.ne.s32.totalorder %s95, %s96
      %p105 = scmp.eq.s32.totalorder %s29, 0
      %p106 = por %p104, %p105
      %p107 = scmp.ne.s32.totalorder %s95, %s96
      %p108 = scmp.eq.s32.totalorder %s30, 3
      %p109 = por %p107, %p108
      %p111 = scmp.ne.s32.totalorder %s96, %s110
      %p112 = scmp.eq.s32.totalorder %s30, 0
      %p113 = por %p111, %p112
      %s115 = sadd.s32 %s114, 1
      %p118 = scmp.eq.s32.totalorder %s24, 3
      %p119 = scmp.ne.s32.totalorder %s114, %s116
      %p120 = scmp.eq.s32.totalorder %s24, 0
      %p121 = por %p119, %p120
      %p122 = scmp.ne.s32.totalorder %s114, %s116
      %p123 = scmp.eq.s32.totalorder %s29, 3
      %p124 = por %p122, %p123
      %p125 = scmp.ne.s32.totalorder %s116, %s117
      %p126 = scmp.eq.s32.totalorder %s29, 0
      %p127 = por %p125, %p126
      %p128 = scmp.ne.s32.totalorder %s116, %s117
      %p129 = scmp.eq.s32.totalorder %s30, 3
      %p130 = por %p128, %p129
      %p132 = scmp.ne.s32.totalorder %s117, %s131
      %p133 = scmp.eq.s32.totalorder %s30, 0
      %p134 = por %p132, %p133
      %s136 = sadd.s32 %s135, 1
      %p139 = scmp.eq.s32.totalorder %s24, 3
      %p140 = scmp.ne.s32.totalorder %s135, %s137
      %p141 = scmp.eq.s32.totalorder %s24, 0
      %p142 = por %p140, %p141
      %p143 = scmp.ne.s32.totalorder %s135, %s137
      %p144 = scmp.eq.s32.totalorder %s29, 3
      %p145 = por %p143, %p144
      %p146 = scmp.ne.s32.totalorder %s137, %s138
      %p147 = scmp.eq.s32.totalorder %s29, 0
      %p148 = por %p146, %p147
      %p149 = scmp.ne.s32.totalorder %s137, %s138
      %p150 = scmp.eq.s32.totalorder %s30, 3
      %p151 = por %p149, %p150
      %p153 = scmp.ne.s32.totalorder %s138, %s152
      %p154 = scmp.eq.s32.totalorder %s30, 0
      %p155 = por %p153, %p154
      %s156 = ssub.s32 %s31, %s43
      %s157 = ssub.s32 %s32, %s39
      %s158 = sor.u32 %s156, %s157
      %p159 = scmp.eq.s32.totalorder %s158, 0
      %s161 = sadd.s32 %s160, 1
      %s162 = scalar_select %p159, %s160, %s161
      %p165 = pneg %p159
      %p166 = scmp.eq.s32.totalorder %s24, 3
      %p167 = por %p165, %p166
      %p168 = scmp.ne.s32.totalorder %s160, %s163
      %p169 = scmp.eq.s32.totalorder %s24, 0
      %p170 = por %p168, %p169
      %p171 = scmp.ne.s32.totalorder %s160, %s163
      %p172 = scmp.eq.s32.totalorder %s29, 3
      %p173 = por %p171, %p172
      %p174 = scmp.ne.s32.totalorder %s163, %s164
      %p175 = scmp.eq.s32.totalorder %s29, 0
      %p176 = por %p174, %p175
      %p177 = scmp.ne.s32.totalorder %s163, %s164
      %p178 = scmp.eq.s32.totalorder %s30, 3
      %p179 = por %p177, %p178
      %p181 = scmp.ne.s32.totalorder %s164, %s180
      %p182 = scmp.eq.s32.totalorder %s30, 0
      %p183 = por %p181, %p182
      %s184 = ssub.s32 %s31, %s43
      %s185 = ssub.s32 %s32, %s39
      %s186 = sor.u32 %s184, %s185
      %p187 = scmp.eq.s32.totalorder %s186, 0
      %s189 = sadd.s32 %s188, 1
      %s190 = scalar_select %p187, %s188, %s189
      %p193 = pneg %p187
      %p194 = scmp.eq.s32.totalorder %s24, 3
      %p195 = por %p193, %p194
      %p196 = scmp.ne.s32.totalorder %s188, %s191
      %p197 = scmp.eq.s32.totalorder %s24, 0
      %p198 = por %p196, %p197
      %p199 = scmp.ne.s32.totalorder %s188, %s191
      %p200 = scmp.eq.s32.totalorder %s29, 3
      %p201 = por %p199, %p200
      %p202 = scmp.ne.s32.totalorder %s191, %s192
      %p203 = scmp.eq.s32.totalorder %s29, 0
      %p204 = por %p202, %p203
      %p205 = scmp.ne.s32.totalorder %s191, %s192
      %p206 = scmp.eq.s32.totalorder %s30, 3
      %p207 = por %p205, %p206
      %p209 = scmp.ne.s32.totalorder %s192, %s208
      %p210 = scmp.eq.s32.totalorder %s30, 0
      %p211 = por %p209, %p210
      %s212 = ssub.s32 %s31, %s43
      %s213 = ssub.s32 %s32, %s39
      %s214 = sor.u32 %s212, %s213
      %p215 = scmp.eq.s32.totalorder %s214, 0
      %s217 = sadd.s32 %s216, 1
      %s218 = scalar_select %p215, %s216, %s217
      %p221 = pneg %p215
      %p222 = scmp.eq.s32.totalorder %s24, 3
      %p223 = por %p221, %p222
      %p224 = scmp.ne.s32.totalorder %s216, %s219
      %p225 = scmp.eq.s32.totalorder %s24, 0
      %p226 = por %p224, %p225
      %p227 = scmp.ne.s32.totalorder %s216, %s219
      %p228 = scmp.eq.s32.totalorder %s29, 3
      %p229 = por %p227, %p228
      %p230 = scmp.ne.s32.totalorder %s219, %s220
      %p231 = scmp.eq.s32.totalorder %s29, 0
      %p232 = por %p230, %p231
      %p233 = scmp.ne.s32.totalorder %s219, %s220
      %p234 = scmp.eq.s32.totalorder %s30, 3
      %p235 = por %p233, %p234
      %p237 = scmp.ne.s32.totalorder %s220, %s236
      %p238 = scmp.eq.s32.totalorder %s30, 0
      %p239 = por %p237, %p238
      %p240 = scmp.le.s32.totalorder 1, %s24
      %p241 = scmp.lt.s32.totalorder %s24, 5
      %p242 = pnand %p240, %p241
      %p243 = pneg %p242
      // Predicated region
      $region9: #{tpu_custom_call.1} parent=5 // pred_check
        _
      $region10: #{tpu_custom_call.1} parent=5 // pred_check_branch
        %245 = sbr.rel (%p242) target = $region12
      $region11: #{tpu_custom_call.1} parent=5 // pred_region
        %s246 = ssub.s32 %s24, 1
        // Predicated region
        $region13: #{tpu_custom_call.1} parent=11 // pred_check
          %p247 = pneg %p85
        $region14: #{tpu_custom_call.1} parent=11 // pred_check_branch
          %249 = sbr.rel (%p247) target = $region16
        $region15: #{tpu_custom_call.1} parent=11 // pred_region
          _
        $region16: #{tpu_custom_call.1} parent=11 // pred_fallthru
          _
        // Predicated region
        $region17: #{tpu_custom_call.1} parent=11 // pred_check
          %p250 = pneg %p106
        $region18: #{tpu_custom_call.1} parent=11 // pred_check_branch
          %252 = sbr.rel (%p250) target = $region20
        $region19: #{tpu_custom_call.1} parent=11 // pred_region
          _
        $region20: #{tpu_custom_call.1} parent=11 // pred_fallthru
          _
        // Predicated region
        $region21: #{tpu_custom_call.1} parent=11 // pred_check
          %p253 = pneg %p127
        $region22: #{tpu_custom_call.1} parent=11 // pred_check_branch
          %255 = sbr.rel (%p253) target = $region24
        $region23: #{tpu_custom_call.1} parent=11 // pred_region
          %s257 = ssub.s32 3072, 3072
          %258 = vsyncadd [#allocation6], %s257
          %s259 = sshll.u32 [#allocation5], 4
          %s260 = int_to_ptr.vmem [resolvable:$true] %s259
          %265 = dma.hbm_to_vmem [thread:$0]  %s3, 3072, %s260, [#allocation6], 192, 192, 12
        $region24: #{tpu_custom_call.1} parent=11 // pred_fallthru
          _
        // Predicated region
        $region25: #{tpu_custom_call.1} parent=11 // pred_check
          %p266 = pneg %p148
        $region26: #{tpu_custom_call.1} parent=11 // pred_check_branch
          %268 = sbr.rel (%p266) target = $region28
        $region27: #{tpu_custom_call.1} parent=11 // pred_region
          _
        $region28: #{tpu_custom_call.1} parent=11 // pred_fallthru
          _
      $region12: #{tpu_custom_call.1} parent=5 // pred_fallthru
        _
      %p269 = scmp.lt.s32.totalorder %s24, 4
      // Predicated region
      $region29: #{tpu_custom_call.1} parent=5 // pred_check
        %p270 = pneg %p269
      $region30: #{tpu_custom_call.1} parent=5 // pred_check_branch
        %272 = sbr.rel (%p270) target = $region32
      $region31: #{tpu_custom_call.1} parent=5 // pred_region
        // Predicated region
        $region33: #{tpu_custom_call.1} parent=31 // pred_check
          %p273 = pneg %p58
        $region34: #{tpu_custom_call.1} parent=31 // pred_check_branch
          %275 = sbr.rel (%p273) target = $region36
        $region35: #{tpu_custom_call.1} parent=31 // pred_region
          %s276 = sand.u32 %s48, 1
          %s277 = scalar_lea.sflag [#allocation3], %s276
          %s278 = sand.u32 %s48, 1
          %s279 = smul.addr %s278, 64
          %s280 = scalar_lea.vmem [#allocation2], %s279
          %s281 = smul.u32 8, %s32
          %s283 = ssub.s32 1024, 1024
          %284 = vsyncadd %s277, %s283
          %s285 = smul.addr %s31, 16
          %s286 = sadd.s32 %s281, %s285
          %s287 = smul.addr %s286, 128
          %s288 = scalar_lea.hbm %s0, %s287
          %s289 = sshll.u32 %s280, 4
          %s290 = int_to_ptr.vmem [resolvable:$true] %s289
          %295 = dma.hbm_to_vmem [thread:$0]  %s288, 1024, %s290, %s277, 128, 128, 8
        $region36: #{tpu_custom_call.1} parent=31 // pred_fallthru
          _
      $region32: #{tpu_custom_call.1} parent=5 // pred_fallthru
        _
      %p296 = scmp.le.s32.totalorder 1, %s24
      %p297 = scmp.lt.s32.totalorder %s24, 5
      %p298 = pnand %p296, %p297
      %p299 = pneg %p298
      // Predicated region
      $region37: #{tpu_custom_call.1} parent=5 // pred_check
        _
      $region38: #{tpu_custom_call.1} parent=5 // pred_check_branch
        %301 = sbr.rel (%p298) target = $region40
      $region39: #{tpu_custom_call.1} parent=5 // pred_region
        %s302 = ssub.s32 %s24, 1
        %s303 = sand.u32 %s51, 1
        %s304 = scalar_lea.sflag [#allocation3], %s303
        %s305 = sand.u32 %s51, 1
        %s306 = smul.addr %s305, 64
        %s307 = scalar_lea.vmem [#allocation2], %s306
        // Predicated region
        $region41: #{tpu_custom_call.1} parent=39 // pred_check
          %p308 = pneg %p64
        $region42: #{tpu_custom_call.1} parent=39 // pred_check_branch
          %310 = sbr.rel (%p308) target = $region44
        $region43: #{tpu_custom_call.1} parent=39 // pred_region
          %311 = dma.done %s304, 1024
        $region44: #{tpu_custom_call.1} parent=39 // pred_fallthru
          _
        // Predicated region
        $region45: #{tpu_custom_call.1} parent=39 // pred_check
          %p312 = pneg %p127
        $region46: #{tpu_custom_call.1} parent=39 // pred_check_branch
          %314 = sbr.rel (%p312) target = $region48
        $region47: #{tpu_custom_call.1} parent=39 // pred_region
          %315 = dma.done [#allocation6], 3072
        $region48: #{tpu_custom_call.1} parent=39 // pred_fallthru
          _
        %s316 = sand.u32 %s51, 1
        %s317 = scalar_lea.sflag [#allocation3], %s316
        %s318 = sand.u32 %s51, 1
        %s319 = smul.addr %s318, 64
        %s320 = scalar_lea.vmem [#allocation2], %s319
        %p321 = pneg %p64
        %p322 = pneg %p61
        %p323 = pneg %p85
        %p324 = pneg %p82
        %p325 = pneg %p106
        %p326 = pneg %p103
        %p327 = pneg %p127
        %p328 = pneg %p124
        %p329 = pneg %p148
        %p330 = pneg %p145
        %p331 = pneg %p176
        %p332 = pneg %p173
        %s333 = sand.u32 %s163, 1
        %s334 = scalar_lea.sflag [#allocation4], %s333
        %s335 = sand.u32 %s163, 1
        %s336 = smul.addr %s335, 32
        %s337 = scalar_lea.vmem [#allocation7], %s336
        %p338 = pneg %p204
        %p339 = pneg %p201
        %s340 = sand.u32 %s29, 1
        %s341 = scalar_lea.sflag [#allocation9], %s340
        %s342 = sand.u32 %s191, 1
        %s343 = smul.addr %s342, 32
        %s344 = scalar_lea.vmem [#allocation8], %s343
        %p345 = pneg %p232
        %p346 = pneg %p229
        %s347 = sand.u32 %s29, 1
        %s348 = scalar_lea.sflag [#allocation9], %s347
        %s349 = sand.u32 %s219, 1
        %s350 = smul.addr %s349, 32
        %s351 = scalar_lea.vmem [#allocation10], %s350
        %s352 = smul.u32 8, %s34
        %s353 = smul.u32 8, %s34
        %s354 = smul.u32 8, %s34
        %s355 = smul.u32 8, %s34
        %v357 = vld [vmem:[%s307] sm:$0xff]
        %v358 = vld [vmem:[%s307 + $0x8] sm:$0xff]
        %v359 = vld [vmem:[%s307 + $0x10] sm:$0xff]
        %v360 = vld [vmem:[%s307 + $0x18] sm:$0xff]
        %v361 = vld [vmem:[%s307 + $0x20] sm:$0xff]
        %v362 = vld [vmem:[%s307 + $0x28] sm:$0xff]
        %v363 = vld [vmem:[%s307 + $0x30] sm:$0xff]
        %v364 = vld [vmem:[%s307 + $0x38] sm:$0xff]
        %365 = vadd.xlane.f32.xlu0 %v357
        %v366 = vpop.xlane.xlu0 %365
        %367 = vadd.xlane.f32.xlu0 %v358
        %v368 = vpop.xlane.xlu0 %367
        %369 = vadd.xlane.f32.xlu0 %v359
        %v370 = vpop.xlane.xlu0 %369
        %371 = vadd.xlane.f32.xlu0 %v360
        %v372 = vpop.xlane.xlu0 %371
        %373 = vadd.xlane.f32.xlu0 %v361
        %v374 = vpop.xlane.xlu0 %373
        %375 = vadd.xlane.f32.xlu0 %v362
        %v376 = vpop.xlane.xlu0 %375
        %377 = vadd.xlane.f32.xlu0 %v363
        %v378 = vpop.xlane.xlu0 %377
        %379 = vadd.xlane.f32.xlu0 %v364
        %v380 = vpop.xlane.xlu0 %379
        %v381 = vrcp.pop 128.0
        %v382 = vmul.f32 %v366, %v381
        %v383 = vmul.f32 %v368, %v381
        %v384 = vmul.f32 %v370, %v381
        %v385 = vmul.f32 %v372, %v381
        %v386 = vmul.f32 %v374, %v381
        %v387 = vmul.f32 %v376, %v381
        %v388 = vmul.f32 %v378, %v381
        %v389 = vmul.f32 %v380, %v381
        %v390 = vsub.f32 %v357, %v382
        %v391 = vsub.f32 %v358, %v383
        %v392 = vsub.f32 %v359, %v384
        %v393 = vsub.f32 %v360, %v385
        %v394 = vsub.f32 %v361, %v386
        %v395 = vsub.f32 %v362, %v387
        %v396 = vsub.f32 %v363, %v388
        %v397 = vsub.f32 %v364, %v389
        %v398 = vmul.f32 %v390, %v390
        %v399 = vmul.f32 %v391, %v391
        %v400 = vmul.f32 %v392, %v392
        %v401 = vmul.f32 %v393, %v393
        %v402 = vmul.f32 %v394, %v394
        %v403 = vmul.f32 %v395, %v395
        %v404 = vmul.f32 %v396, %v396
        %v405 = vmul.f32 %v397, %v397
        %406 = vadd.xlane.f32.xlu0 %v398
        %v407 = vpop.xlane.xlu0 %406
        %408 = vadd.xlane.f32.xlu0 %v399
        %v409 = vpop.xlane.xlu0 %408
        %410 = vadd.xlane.f32.xlu0 %v400
        %v411 = vpop.xlane.xlu0 %410
        %412 = vadd.xlane.f32.xlu0 %v401
        %v413 = vpop.xlane.xlu0 %412
        %414 = vadd.xlane.f32.xlu0 %v402
        %v415 = vpop.xlane.xlu0 %414
        %416 = vadd.xlane.f32.xlu0 %v403
        %v417 = vpop.xlane.xlu0 %416
        %418 = vadd.xlane.f32.xlu0 %v404
        %v419 = vpop.xlane.xlu0 %418
        %420 = vadd.xlane.f32.xlu0 %v405
        %v421 = vpop.xlane.xlu0 %420
        %v422 = vmul.f32 %v407, %v381
        %v423 = vmul.f32 %v409, %v381
        %v424 = vmul.f32 %v411, %v381
        %v425 = vmul.f32 %v413, %v381
        %v426 = vmul.f32 %v415, %v381
        %v427 = vmul.f32 %v417, %v381
        %v428 = vmul.f32 %v419, %v381
        %v429 = vmul.f32 %v421, %v381
        %v430 = vadd.f32 %v422, 1e-05
        %v431 = vadd.f32 %v423, 1e-05
        %v432 = vadd.f32 %v424, 1e-05
        %v433 = vadd.f32 %v425, 1e-05
        %v434 = vadd.f32 %v426, 1e-05
        %v435 = vadd.f32 %v427, 1e-05
        %v436 = vadd.f32 %v428, 1e-05
        %v437 = vadd.f32 %v429, 1e-05
        %v438 = vrsqrt.pop %v430
        %v439 = vrsqrt.pop %v431
        %v440 = vrsqrt.pop %v432
        %v441 = vrsqrt.pop %v433
        %v442 = vrsqrt.pop %v434
        %v443 = vrsqrt.pop %v435
        %v444 = vrsqrt.pop %v436
        %v445 = vrsqrt.pop %v437
        %v446 = vmul.f32 %v390, %v438
        %v447 = vmul.f32 %v391, %v439
        %v448 = vmul.f32 %v392, %v440
        %v449 = vmul.f32 %v393, %v441
        %v450 = vmul.f32 %v394, %v442
        %v451 = vmul.f32 %v395, %v443
        %v452 = vmul.f32 %v396, %v444
        %v453 = vmul.f32 %v397, %v445
        %v454 = vld [vmem:[%s1] sm:$0x1]
        %v456 = vlaneseq
        %v457 = vshrl.u32 %v456, 7
        %v458 = vsub.s32 0, %v457
        %v459 = vrot.slane %v454, %v458
        %v461 = vmul.f32 %v446, %v459
        %v462 = vmul.f32 %v447, %v459
        %v463 = vmul.f32 %v448, %v459
        %v464 = vmul.f32 %v449, %v459
        %v465 = vmul.f32 %v450, %v459
        %v466 = vmul.f32 %v451, %v459
        %v467 = vmul.f32 %v452, %v459
        %v468 = vmul.f32 %v453, %v459
        %v469 = vld [vmem:[%s2] sm:$0x1]
        %v471 = vlaneseq
        %v472 = vshrl.u32 %v471, 7
        %v473 = vsub.s32 0, %v472
        %v474 = vrot.slane %v469, %v473
        %v476 = vadd.f32 %v461, %v474
        %v477 = vadd.f32 %v462, %v474
        %v478 = vadd.f32 %v463, %v474
        %v479 = vadd.f32 %v464, %v474
        %v480 = vadd.f32 %v465, %v474
        %v481 = vadd.f32 %v466, %v474
        %v482 = vadd.f32 %v467, %v474
        %v483 = vadd.f32 %v468, %v474
        %v484 = vpack.c.bf16 %v477, %v476
        %v485 = vpack.c.bf16 %v479, %v478
        %v486 = vpack.c.bf16 %v481, %v480
        %v487 = vpack.c.bf16 %v483, %v482
        %v488 = vld [vmem:[#allocation5] sm:$0xff]
        %v489 = vld [vmem:[#allocation5 + $0x8] sm:$0xf]
        %v490 = vld [vmem:[#allocation5 + $0xc] sm:$0xff]
        %v491 = vld [vmem:[#allocation5 + $0x14] sm:$0xf]
        %v492 = vld [vmem:[#allocation5 + $0x18] sm:$0xff]
        %v493 = vld [vmem:[#allocation5 + $0x20] sm:$0xf]
        %v494 = vld [vmem:[#allocation5 + $0x24] sm:$0xff]
        %v495 = vld [vmem:[#allocation5 + $0x2c] sm:$0xf]
        %v496 = vld [vmem:[#allocation5 + $0x30] sm:$0xff]
        %v497 = vld [vmem:[#allocation5 + $0x38] sm:$0xf]
        %v498 = vld [vmem:[#allocation5 + $0x3c] sm:$0xff]
        %v499 = vld [vmem:[#allocation5 + $0x44] sm:$0xf]
        %v500 = vld [vmem:[#allocation5 + $0x48] sm:$0xff]
        %v501 = vld [vmem:[#allocation5 + $0x50] sm:$0xf]
        %v502 = vld [vmem:[#allocation5 + $0x54] sm:$0xff]
        %v503 = vld [vmem:[#allocation5 + $0x5c] sm:$0xf]
        %v504 = vld [vmem:[#allocation5 + $0x60] sm:$0xff]
        %v505 = vld [vmem:[#allocation5 + $0x68] sm:$0xf]
        %v506 = vld [vmem:[#allocation5 + $0x6c] sm:$0xff]
        %v507 = vld [vmem:[#allocation5 + $0x74] sm:$0xf]
        %v508 = vld [vmem:[#allocation5 + $0x78] sm:$0xff]
        %v509 = vld [vmem:[#allocation5 + $0x80] sm:$0xf]
        %v510 = vld [vmem:[#allocation5 + $0x84] sm:$0xff]
        %v511 = vld [vmem:[#allocation5 + $0x8c] sm:$0xf]
        %v512 = vld [vmem:[#allocation5 + $0x90] sm:$0xff]
        %v513 = vld [vmem:[#allocation5 + $0x98] sm:$0xf]
        %v514 = vld [vmem:[#allocation5 + $0x9c] sm:$0xff]
        %v515 = vld [vmem:[#allocation5 + $0xa4] sm:$0xf]
        %v516 = vld [vmem:[#allocation5 + $0xa8] sm:$0xff]
        %v517 = vld [vmem:[#allocation5 + $0xb0] sm:$0xf]
        %v518 = vld [vmem:[#allocation5 + $0xb4] sm:$0xff]
        %v519 = vld [vmem:[#allocation5 + $0xbc] sm:$0xf]
        %v520 = vld [vmem:[%s4] sm:$0x7]
        %v522 = vlaneseq
        %v523 = vshrl.u32 %v522, 7
        %v524 = vsub.s32 0, %v523
        %v525 = vrot.slane %v520, %v524
        %v526 = vlaneseq
        %v527 = vshrl.u32 %v526, 7
        %v528 = vsub.s32 1, %v527
        %v529 = vrot.slane %v520, %v528
        %v530 = vlaneseq
        %v531 = vshrl.u32 %v530, 7
        %v532 = vsub.s32 2, %v531
        %v533 = vrot.slane %v520, %v532
        %v569 = vunpack.c.l.b16 %v488
        %v570 = vunpack.c.h.b16 %v488
        %v571 = vunpack.c.l.b16 %v489
        %v572 = vunpack.c.l.b16 %v490
        %v573 = vunpack.c.h.b16 %v490
        %v574 = vunpack.c.l.b16 %v491
        %v575 = vunpack.c.l.b16 %v492
        %v576 = vunpack.c.h.b16 %v492
        %v577 = vunpack.c.l.b16 %v493
        %v578 = vunpack.c.l.b16 %v494
        %v579 = vunpack.c.h.b16 %v494
        %v580 = vunpack.c.l.b16 %v495
        %v581 = vunpack.c.l.b16 %v496
        %v582 = vunpack.c.h.b16 %v496
        %v583 = vunpack.c.l.b16 %v497
        %v584 = vunpack.c.l.b16 %v498
        %v585 = vunpack.c.h.b16 %v498
        %v586 = vunpack.c.l.b16 %v499
        %v587 = vunpack.c.l.b16 %v500
        %v588 = vunpack.c.h.b16 %v500
        %v589 = vunpack.c.l.b16 %v501
        %v590 = vunpack.c.l.b16 %v502
        %v591 = vunpack.c.h.b16 %v502
        %v592 = vunpack.c.l.b16 %v503
        %v593 = vunpack.c.l.b16 %v504
        %v594 = vunpack.c.h.b16 %v504
        %v595 = vunpack.c.l.b16 %v505
        %v596 = vunpack.c.l.b16 %v506
        %v597 = vunpack.c.h.b16 %v506
        %v598 = vunpack.c.l.b16 %v507
        %v599 = vunpack.c.l.b16 %v508
        %v600 = vunpack.c.h.b16 %v508
        %v601 = vunpack.c.l.b16 %v509
        %v602 = vunpack.c.l.b16 %v510
        %v603 = vunpack.c.h.b16 %v510
        %v604 = vunpack.c.l.b16 %v511
        %v605 = vunpack.c.l.b16 %v512
        %v606 = vunpack.c.h.b16 %v512
        %v607 = vunpack.c.l.b16 %v513
        %v608 = vunpack.c.l.b16 %v514
        %v609 = vunpack.c.h.b16 %v514
        %v610 = vunpack.c.l.b16 %v515
        %v611 = vunpack.c.l.b16 %v516
        %v612 = vunpack.c.h.b16 %v516
        %v613 = vunpack.c.l.b16 %v517
        %v614 = vunpack.c.l.b16 %v518
        %v615 = vunpack.c.h.b16 %v518
        %v616 = vunpack.c.l.b16 %v519
        %v617 = vpack.c.b16 %v572, %v569
        %v618 = vpack.c.b16 %v573, %v570
        %v619 = vpack.c.b16 %v574, %v571
        %v620 = vpack.c.b16 %v578, %v575
        %v621 = vpack.c.b16 %v579, %v576
        %v622 = vpack.c.b16 %v580, %v577
        %v623 = vpack.c.b16 %v584, %v581
        %v624 = vpack.c.b16 %v585, %v582
        %v625 = vpack.c.b16 %v586, %v583
        %v626 = vpack.c.b16 %v590, %v587
        %v627 = vpack.c.b16 %v591, %v588
        %v628 = vpack.c.b16 %v592, %v589
        %v629 = vpack.c.b16 %v596, %v593
        %v630 = vpack.c.b16 %v597, %v594
        %v631 = vpack.c.b16 %v598, %v595
        %v632 = vpack.c.b16 %v602, %v599
        %v633 = vpack.c.b16 %v603, %v600
        %v634 = vpack.c.b16 %v604, %v601
        %v635 = vpack.c.b16 %v608, %v605
        %v636 = vpack.c.b16 %v609, %v606
        %v637 = vpack.c.b16 %v610, %v607
        %v638 = vpack.c.b16 %v614, %v611
        %v639 = vpack.c.b16 %v615, %v612
        %v640 = vpack.c.b16 %v616, %v613
        %665 = vmatprep.subr.bf16.mxu0 %v639
        %666 = vmatpush1.bf16.msra.mxu0 %v638
        %667 = vmatprep.subr.bf16.mxu0 %v636
        %668 = vmatpush1.bf16.msra.mxu0 %v635
        %669 = vmatprep.subr.bf16.mxu0 %v633
        %670 = vmatpush1.bf16.msra.mxu0 %v632
        %671 = vmatprep.subr.bf16.mxu0 %v630
        %672 = vmatpush1.bf16.msra.mxu0 %v629
        %673 = vmatprep.subr.bf16.mxu0 %v627
        %674 = vmatpush1.bf16.msra.mxu0 %v626
        %675 = vmatprep.subr.bf16.mxu0 %v624
        %676 = vmatpush1.bf16.msra.mxu0 %v623
        %677 = vmatprep.subr.bf16.mxu0 %v621
        %678 = vmatpush1.bf16.msra.mxu0 %v620
        %679 = vmatprep.subr.bf16.mxu0 %v618
        %680 = vmatpush1.bf16.msra.mxu0 %v617
        %681 = vmatprep.subr.bf16.mxu0 0
        %682 = vmatpush2.bf16.msra.mxu0 0
        %683 = vmatprep.subr.bf16.mxu0 0
        %684 = vmatpush2.bf16.msra.mxu0 0
        %685 = vmatprep.subr.bf16.mxu0 0
        %686 = vmatpush2.bf16.msra.mxu0 0
        %687 = vmatprep.subr.bf16.mxu0 0
        %688 = vmatpush2.bf16.msra.mxu0 0
        %689 = vmatprep.subr.bf16.mxu0 0
        %690 = vmatpush2.bf16.msra.mxu0 0
        %691 = vmatprep.subr.bf16.mxu0 0
        %692 = vmatpush2.bf16.msra.mxu0 0
        %693 = vmatprep.subr.bf16.mxu0 0
        %694 = vmatpush2.bf16.msra.mxu0 0
        %695 = vmatprep.subr.bf16.mxu0 0
        %696 = vmatpush2.bf16.msra.mxu0 0
        %697 = vmatprep.mubr.bf16.mxu0 0
        %698 = vmatmul.mubr.bf16.gmra.mxu0 %v484
        %v699 = vpop.f32.mrf.mxu0
        %v700 = vadd.f32 %v525, %v699
        %v701 = vpop.f32.mrf.mxu0
        %v702 = vadd.f32 %v529, %v701
        %v703 = vpop.f32.mrf.mxu0
        %v704 = vadd.f32 %v525, %v703
        %v705 = vpop.f32.mrf.mxu0
        %v706 = vadd.f32 %v529, %v705
        %707 = vmatprep.mubr.bf16.mxu0 0
        %708 = vmatmul.mubr.bf16.gmra.mxu0 %v485
        %v709 = vpop.f32.mrf.mxu0
        %v710 = vadd.f32 %v525, %v709
        %v711 = vpop.f32.mrf.mxu0
        %v712 = vadd.f32 %v529, %v711
        %v713 = vpop.f32.mrf.mxu0
        %v714 = vadd.f32 %v525, %v713
        %v715 = vpop.f32.mrf.mxu0
        %v716 = vadd.f32 %v529, %v715
        %717 = vmatprep.mubr.bf16.mxu0 0
        %718 = vmatmul.mubr.bf16.gmra.mxu0 %v486
        %v719 = vpop.f32.mrf.mxu0
        %v720 = vadd.f32 %v525, %v719
        %v721 = vpop.f32.mrf.mxu0
        %v722 = vadd.f32 %v529, %v721
        %v723 = vpop.f32.mrf.mxu0
        %v724 = vadd.f32 %v525, %v723
        %v725 = vpop.f32.mrf.mxu0
        %v726 = vadd.f32 %v529, %v725
        %727 = vmatprep.mubr.bf16.mxu0 0
        %728 = vmatmul.mubr.bf16.gmra.mxu0 %v487
        %v729 = vpop.f32.mrf.mxu0
        %v730 = vadd.f32 %v525, %v729
        %v731 = vpop.f32.mrf.mxu0
        %v732 = vadd.f32 %v529, %v731
        %v733 = vpop.f32.mrf.mxu0
        %v734 = vadd.f32 %v525, %v733
        %v735 = vpop.f32.mrf.mxu0
        %v736 = vadd.f32 %v529, %v735
        %737 = vdwg.mxu0
        %738 = vmatprep.subr.bf16.mxu0 0
        %739 = vmatpush1.bf16.msra.mxu0 %v640
        %740 = vmatprep.subr.bf16.mxu0 0
        %741 = vmatpush1.bf16.msra.mxu0 %v637
        %742 = vmatprep.subr.bf16.mxu0 0
        %743 = vmatpush1.bf16.msra.mxu0 %v634
        %744 = vmatprep.subr.bf16.mxu0 0
        %745 = vmatpush1.bf16.msra.mxu0 %v631
        %746 = vmatprep.subr.bf16.mxu0 0
        %747 = vmatpush1.bf16.msra.mxu0 %v628
        %748 = vmatprep.subr.bf16.mxu0 0
        %749 = vmatpush1.bf16.msra.mxu0 %v625
        %750 = vmatprep.subr.bf16.mxu0 0
        %751 = vmatpush1.bf16.msra.mxu0 %v622
        %752 = vmatprep.subr.bf16.mxu0 0
        %753 = vmatpush1.bf16.msra.mxu0 %v619
        %754 = vmatprep.subr.bf16.mxu0 0
        %755 = vmatpush2.bf16.msra.mxu0 0
        %756 = vmatprep.subr.bf16.mxu0 0
        %757 = vmatpush2.bf16.msra.mxu0 0
        %758 = vmatprep.subr.bf16.mxu0 0
        %759 = vmatpush2.bf16.msra.mxu0 0
        %760 = vmatprep.subr.bf16.mxu0 0
        %761 = vmatpush2.bf16.msra.mxu0 0
        %762 = vmatprep.subr.bf16.mxu0 0
        %763 = vmatpush2.bf16.msra.mxu0 0
        %764 = vmatprep.subr.bf16.mxu0 0
        %765 = vmatpush2.bf16.msra.mxu0 0
        %766 = vmatprep.subr.bf16.mxu0 0
        %767 = vmatpush2.bf16.msra.mxu0 0
        %768 = vmatprep.subr.bf16.mxu0 0
        %769 = vmatpush2.bf16.msra.mxu0 0
        %770 = vmatprep.mubr.bf16.mxu0 0
        %771 = vmatmul.mubr.bf16.gmra.mxu0 %v484
        %v772 = vpop.f32.mrf.mxu0
        %v773 = vadd.f32 %v533, %v772
        %v774 = vpop.f32.mrf.mxu0
        %v775 = vpop.f32.mrf.mxu0
        %v776 = vadd.f32 %v533, %v775
        %v777 = vpop.f32.mrf.mxu0
        %778 = vmatprep.mubr.bf16.mxu0 0
        %779 = vmatmul.mubr.bf16.gmra.mxu0 %v485
        %v780 = vpop.f32.mrf.mxu0
        %v781 = vadd.f32 %v533, %v780
        %v782 = vpop.f32.mrf.mxu0
        %v783 = vpop.f32.mrf.mxu0
        %v784 = vadd.f32 %v533, %v783
        %v785 = vpop.f32.mrf.mxu0
        %786 = vmatprep.mubr.bf16.mxu0 0
        %787 = vmatmul.mubr.bf16.gmra.mxu0 %v486
        %v788 = vpop.f32.mrf.mxu0
        %v789 = vadd.f32 %v533, %v788
        %v790 = vpop.f32.mrf.mxu0
        %v791 = vpop.f32.mrf.mxu0
        %v792 = vadd.f32 %v533, %v791
        %v793 = vpop.f32.mrf.mxu0
        %794 = vmatprep.mubr.bf16.mxu0 0
        %795 = vmatmul.mubr.bf16.gmra.mxu0 %v487
        %v796 = vpop.f32.mrf.mxu0
        %v797 = vadd.f32 %v533, %v796
        %v798 = vpop.f32.mrf.mxu0
        %v799 = vpop.f32.mrf.mxu0
        %v800 = vadd.f32 %v533, %v799
        %v801 = vpop.f32.mrf.mxu0
        %802 = vdwg.mxu0
        %v803 = vmul.f32 %v700, 0.125
        %v804 = vmul.f32 %v704, 0.125
        %v805 = vmul.f32 %v710, 0.125
        %v806 = vmul.f32 %v714, 0.125
        %v807 = vmul.f32 %v720, 0.125
        %v808 = vmul.f32 %v724, 0.125
        %v809 = vmul.f32 %v730, 0.125
        %v810 = vmul.f32 %v734, 0.125
        %v811 = vpack.c.bf16 %v804, %v803
        %v812 = vpack.c.bf16 %v806, %v805
        %v813 = vpack.c.bf16 %v808, %v807
        %v814 = vpack.c.bf16 %v810, %v809
        %v819 = vunpack.c.l.b16 %v811
        %v820 = vunpack.c.h.b16 %v811
        %v821 = vunpack.c.l.b16 %v812
        %v822 = vunpack.c.h.b16 %v812
        %v823 = vunpack.c.l.b16 %v813
        %v824 = vunpack.c.h.b16 %v813
        %v825 = vunpack.c.l.b16 %v814
        %v826 = vunpack.c.h.b16 %v814
        %v827 = vpack.c.b16 %v819, %v819
        %v828 = vpack.c.b16 %v820, %v820
        %v829 = vpack.c.b16 %v821, %v821
        %v830 = vpack.c.b16 %v822, %v822
        %v831 = vpack.c.b16 %v823, %v823
        %v832 = vpack.c.b16 %v824, %v824
        %v833 = vpack.c.b16 %v825, %v825
        %v834 = vpack.c.b16 %v826, %v826
        %843 = vst [vmem:[%s337] sm:$0xf] %v827
        %844 = vst [vmem:[%s337 + $0x4] sm:$0xf] %v828
        %845 = vst [vmem:[%s337 + $0x8] sm:$0xf] %v829
        %846 = vst [vmem:[%s337 + $0xc] sm:$0xf] %v830
        %847 = vst [vmem:[%s337 + $0x10] sm:$0xf] %v831
        %848 = vst [vmem:[%s337 + $0x14] sm:$0xf] %v832
        %849 = vst [vmem:[%s337 + $0x18] sm:$0xf] %v833
        %850 = vst [vmem:[%s337 + $0x1c] sm:$0xf] %v834
        %v851 = vpack.c.bf16 %v706, %v702
        %v852 = vpack.c.bf16 %v716, %v712
        %v853 = vpack.c.bf16 %v726, %v722
        %v854 = vpack.c.bf16 %v736, %v732
        %v859 = vunpack.c.l.b16 %v851
        %v860 = vunpack.c.h.b16 %v851
        %v861 = vunpack.c.l.b16 %v852
        %v862 = vunpack.c.h.b16 %v852
        %v863 = vunpack.c.l.b16 %v853
        %v864 = vunpack.c.h.b16 %v853
        %v865 = vunpack.c.l.b16 %v854
        %v866 = vunpack.c.h.b16 %v854
        %v867 = vpack.c.b16 %v859, %v859
        %v868 = vpack.c.b16 %v860, %v860
        %v869 = vpack.c.b16 %v861, %v861
        %v870 = vpack.c.b16 %v862, %v862
        %v871 = vpack.c.b16 %v863, %v863
        %v872 = vpack.c.b16 %v864, %v864
        %v873 = vpack.c.b16 %v865, %v865
        %v874 = vpack.c.b16 %v866, %v866
        %883 = vst [vmem:[%s344] sm:$0xf] %v867
        %884 = vst [vmem:[%s344 + $0x4] sm:$0xf] %v868
        %885 = vst [vmem:[%s344 + $0x8] sm:$0xf] %v869
        %886 = vst [vmem:[%s344 + $0xc] sm:$0xf] %v870
        %887 = vst [vmem:[%s344 + $0x10] sm:$0xf] %v871
        %888 = vst [vmem:[%s344 + $0x14] sm:$0xf] %v872
        %889 = vst [vmem:[%s344 + $0x18] sm:$0xf] %v873
        %890 = vst [vmem:[%s344 + $0x1c] sm:$0xf] %v874
        %v891 = vpack.c.bf16 %v776, %v773
        %v892 = vpack.c.bf16 %v784, %v781
        %v893 = vpack.c.bf16 %v792, %v789
        %v894 = vpack.c.bf16 %v800, %v797
        %v899 = vunpack.c.l.b16 %v891
        %v900 = vunpack.c.h.b16 %v891
        %v901 = vunpack.c.l.b16 %v892
        %v902 = vunpack.c.h.b16 %v892
        %v903 = vunpack.c.l.b16 %v893
        %v904 = vunpack.c.h.b16 %v893
        %v905 = vunpack.c.l.b16 %v894
        %v906 = vunpack.c.h.b16 %v894
        %v907 = vpack.c.b16 %v899, %v899
        %v908 = vpack.c.b16 %v900, %v900
        %v909 = vpack.c.b16 %v901, %v901
        %v910 = vpack.c.b16 %v902, %v902
        %v911 = vpack.c.b16 %v903, %v903
        %v912 = vpack.c.b16 %v904, %v904
        %v913 = vpack.c.b16 %v905, %v905
        %v914 = vpack.c.b16 %v906, %v906
        %923 = vst [vmem:[%s351] sm:$0xf] %v907
        %924 = vst [vmem:[%s351 + $0x4] sm:$0xf] %v908
        %925 = vst [vmem:[%s351 + $0x8] sm:$0xf] %v909
        %926 = vst [vmem:[%s351 + $0xc] sm:$0xf] %v910
        %927 = vst [vmem:[%s351 + $0x10] sm:$0xf] %v911
        %928 = vst [vmem:[%s351 + $0x14] sm:$0xf] %v912
        %929 = vst [vmem:[%s351 + $0x18] sm:$0xf] %v913
        %930 = vst [vmem:[%s351 + $0x1c] sm:$0xf] %v914
        %s931 = sand.u32 %s163, 1
        %s932 = scalar_lea.sflag [#allocation4], %s931
        %s933 = sand.u32 %s163, 1
        %s934 = smul.addr %s933, 32
        %s935 = scalar_lea.vmem [#allocation7], %s934
        %s936 = sand.u32 %s29, 1
        %s937 = scalar_lea.sflag [#allocation9], %s936
        %s938 = sand.u32 %s191, 1
        %s939 = smul.addr %s938, 32
        %s940 = scalar_lea.vmem [#allocation8], %s939
        %s941 = sand.u32 %s29, 1
        %s942 = scalar_lea.sflag [#allocation9], %s941
        %s943 = sand.u32 %s219, 1
        %s944 = smul.addr %s943, 32
        %s945 = scalar_lea.vmem [#allocation10], %s944
        // Predicated region
        $region49: #{tpu_custom_call.1} parent=39 // pred_check
          %p946 = pneg %p173
        $region50: #{tpu_custom_call.1} parent=39 // pred_check_branch
          %948 = sbr.rel (%p946) target = $region52
        $region51: #{tpu_custom_call.1} parent=39 // pred_region
          %s949 = smul.u32 8, %s34
          %s951 = ssub.s32 512, 512
          %952 = vsyncadd %s932, %s951
          %s953 = smul.addr %s33, 16
          %s954 = sadd.s32 %s949, %s953
          %s955 = smul.addr %s954, 64
          %s956 = scalar_lea.hbm %s5, %s955
          %s957 = sshll.u32 %s935, 4
          %s958 = int_to_ptr.vmem [resolvable:$true] %s957
          %963 = dma.vmem_to_hbm [thread:$0]  %s958, 512, %s956, %s932, 64, 64, 4
        $region52: #{tpu_custom_call.1} parent=39 // pred_fallthru
          _
        // Predicated region
        $region53: #{tpu_custom_call.1} parent=39 // pred_check
          %p964 = pneg %p201
        $region54: #{tpu_custom_call.1} parent=39 // pred_check_branch
          %966 = sbr.rel (%p964) target = $region56
        $region55: #{tpu_custom_call.1} parent=39 // pred_region
          %s967 = smul.u32 8, %s34
          %s969 = ssub.s32 512, 512
          %970 = vsyncadd %s937, %s969
          %s971 = smul.addr %s33, 16
          %s972 = sadd.s32 %s967, %s971
          %s973 = smul.addr %s972, 64
          %s974 = scalar_lea.hbm %s6, %s973
          %s975 = sshll.u32 %s940, 4
          %s976 = int_to_ptr.vmem [resolvable:$true] %s975
          %981 = dma.vmem_to_hbm [thread:$0]  %s976, 512, %s974, %s937, 64, 64, 4
        $region56: #{tpu_custom_call.1} parent=39 // pred_fallthru
          _
        // Predicated region
        $region57: #{tpu_custom_call.1} parent=39 // pred_check
          %p982 = pneg %p229
        $region58: #{tpu_custom_call.1} parent=39 // pred_check_branch
          %984 = sbr.rel (%p982) target = $region60
        $region59: #{tpu_custom_call.1} parent=39 // pred_region
          %s985 = smul.u32 8, %s34
          %s987 = ssub.s32 512, 512
          %988 = vsyncadd %s942, %s987
          %s989 = smul.addr %s33, 16
          %s990 = sadd.s32 %s985, %s989
          %s991 = smul.addr %s990, 64
          %s992 = scalar_lea.hbm %s7, %s991
          %s993 = sshll.u32 %s945, 4
          %s994 = int_to_ptr.vmem [resolvable:$true] %s993
          %999 = dma.vmem_to_hbm [thread:$0]  %s994, 512, %s992, %s942, 64, 64, 4
        $region60: #{tpu_custom_call.1} parent=39 // pred_fallthru
          _
      $region40: #{tpu_custom_call.1} parent=5 // pred_fallthru
        _
      %p1000 = scmp.le.s32.totalorder 2, %s24
      // Predicated region
      $region61: #{tpu_custom_call.1} parent=5 // pred_check
        %p1001 = pneg %p1000
      $region62: #{tpu_custom_call.1} parent=5 // pred_check_branch
        %1003 = sbr.rel (%p1001) target = $region64
      $region63: #{tpu_custom_call.1} parent=5 // pred_region
        %s1004 = ssub.s32 %s24, 2
        // Predicated region
        $region65: #{tpu_custom_call.1} parent=63 // pred_check
          %p1005 = pneg %p179
        $region66: #{tpu_custom_call.1} parent=63 // pred_check_branch
          %1007 = sbr.rel (%p1005) target = $region68
        $region67: #{tpu_custom_call.1} parent=63 // pred_region
          %s1008 = sand.u32 %s164, 1
          %s1009 = scalar_lea.sflag [#allocation4], %s1008
          %s1010 = sand.u32 %s164, 1
          %s1011 = smul.addr %s1010, 32
          %s1012 = scalar_lea.vmem [#allocation7], %s1011
          %1013 = dma.done %s1009, 512
        $region68: #{tpu_custom_call.1} parent=63 // pred_fallthru
          _
        // Predicated region
        $region69: #{tpu_custom_call.1} parent=63 // pred_check
          %p1014 = pneg %p207
        $region70: #{tpu_custom_call.1} parent=63 // pred_check_branch
          %1016 = sbr.rel (%p1014) target = $region72
        $region71: #{tpu_custom_call.1} parent=63 // pred_region
          %s1017 = sand.u32 %s30, 1
          %s1018 = scalar_lea.sflag [#allocation9], %s1017
          %s1019 = sand.u32 %s192, 1
          %s1020 = smul.addr %s1019, 32
          %s1021 = scalar_lea.vmem [#allocation8], %s1020
          %1022 = dma.done %s1018, 512
        $region72: #{tpu_custom_call.1} parent=63 // pred_fallthru
          _
        // Predicated region
        $region73: #{tpu_custom_call.1} parent=63 // pred_check
          %p1023 = pneg %p235
        $region74: #{tpu_custom_call.1} parent=63 // pred_check_branch
          %1025 = sbr.rel (%p1023) target = $region76
        $region75: #{tpu_custom_call.1} parent=63 // pred_region
          %s1026 = sand.u32 %s30, 1
          %s1027 = scalar_lea.sflag [#allocation9], %s1026
          %s1028 = sand.u32 %s220, 1
          %s1029 = smul.addr %s1028, 32
          %s1030 = scalar_lea.vmem [#allocation10], %s1029
          %1031 = dma.done %s1027, 512
        $region76: #{tpu_custom_call.1} parent=63 // pred_fallthru
          _
      $region64: #{tpu_custom_call.1} parent=5 // pred_fallthru
        _
    $region6: #{tpu_custom_call.1} parent=1 // loop_footer
      %s28 = sadd.s32 1, %s24
    $region7: #{tpu_custom_call.1} parent=1 // loop_footer_branch
      %23 = sbr.rel target = $region3
    $region8: #{tpu_custom_call.1} parent=1 // loop_exit
      _
    %1032 = vsyncpa [#allocation3], 1
    %s1033 = scalar_lea.sflag [#allocation3], 1
    %1034 = vsyncpa %s1033, 1
    %1035 = vsyncpa [#allocation6], 1
    %1036 = vsyncpa [#allocation4], 1
    %s1037 = scalar_lea.sflag [#allocation4], 1
    %1038 = vsyncpa %s1037, 1
    %1039 = vsyncpa [#allocation9], 1
    %s1040 = scalar_lea.sflag [#allocation9], 1
    %1041 = vsyncpa %s1040, 1

</llo_original>
